<compile_context>
chip_gen: v6e
topology: v6e:2x2x1
jax: 0.10.0
libtpu: 0.0.40
codegen_flags: <defaults>
</compile_context>

<pallas_src>
import functools

import jax
import jax.numpy as jnp
from jax import lax
from jax.experimental import pallas as pl
from jax.experimental.pallas import tpu as pltpu

GAMMA = 1.5
ALPHA = 0.25
LANES = 128


def _round_up(a, b):
    return (a + b - 1) // b * b


@functools.lru_cache(maxsize=1)
def _chip_info():
    """(device_kind lowercase, tensorcores per chip)."""
    try:
        kind = jax.devices()[0].device_kind.lower()
    except Exception:
        kind = ""
    cores = 2 if ("v7" in kind or "7x" in kind) else 1
    return kind, cores


def _max_tile_rows(kind):
    # Dtype-independent cap (the f32 intermediates dominate the VMEM budget).
    if "v6" in kind:
        return 8192
    if "v5" in kind or "v7" in kind or "7x" in kind:
        return 4096
    return 2048          # unknown chip: previously-validated conservative size


def _vmem_limit_bytes(kind):
    if "v6" in kind:
        return 100 * 1024 * 1024    # 128 MiB physical
    if "v5" in kind:
        return 64 * 1024 * 1024     # 128 MiB physical, 16 MiB scoped default
    if "v7" in kind or "7x" in kind:
        return 48 * 1024 * 1024     # 64 MiB physical per TC
    return None


def _row_align(dtype):
    # Minimum sublane multiple for the block row dim, per element size.
    return {4: 8, 2: 16, 1: 32}.get(jnp.dtype(dtype).itemsize, 8)


def _compiler_params(kind, dim_sems):
    kwargs = dict(dimension_semantics=dim_sems)
    lim = _vmem_limit_bytes(kind)
    if lim is not None:
        kwargs["vmem_limit_bytes"] = lim
    return pltpu.CompilerParams(**kwargs)


def _focal_loss_kernel(pred_ref, true_ref, out_ref, *,
                       gamma, alpha, approx_recip,
                       steps, tile_rows, acc_rows,
                       full_rows, rem, needs_mask):
    c = pl.program_id(0)    # shard (TensorCore on v7x; size-1 axis elsewhere)
    i = pl.program_id(1)    # step within shard (reduction axis)

    @pl.when(i == 0)
    def _():
        out_ref[...] = jnp.zeros_like(out_ref)

    x = pred_ref[...].astype(jnp.float32)
    z = true_ref[...].astype(jnp.float32)

    # Shared transcendentals (one exp, one log, one rcp, one sqrt per element):
    #   e   = exp(-|x|)
    #   BCEWithLogits('none') = max(x,0) - x*z + log(1 + e)     (log1p-lite)
    #   1 - p_t = d * (q + (1-q)*e),  d = 1/(1+e),  q = (1-z) if x>=0 else z
    e = jnp.exp(-jnp.abs(x))
    ope = 1.0 + e
    if approx_recip:
        d = pl.reciprocal(ope, approx=True)     # EUP vrcp, ~2^-12 rel error
    else:
        d = 1.0 / ope
    bce = jnp.maximum(x, 0.0) - x * z + jnp.log(ope)

    q = jnp.where(x >= 0.0, 1.0 - z, z)
    t = d * (q + (1.0 - q) * e)                 # == 1 - p_t  (>= 0 for targets in [0,1])
    if float(gamma) == 1.5:
        mod = t * jnp.sqrt(t)                   # t**1.5 without pow (exp+log)
    elif float(gamma) == 2.0:
        mod = t * t
    elif float(gamma) == 1.0:
        mod = t
    else:
        mod = t ** gamma
    alpha_factor = (1.0 - alpha) + (2.0 * alpha - 1.0) * z
    loss = bce * alpha_factor * mod

    def _accumulate(vals):
        # Fold tile rows into the (acc_rows, LANES) accumulator: pure VPU adds, no XLU.
        out_ref[...] += vals.reshape(tile_rows // acc_rows, acc_rows, LANES).sum(axis=0)[None]

    if not needs_mask:
        _accumulate(loss)
    else:
        blk = c * steps + i
        fully_valid = (blk + 1) * tile_rows <= full_rows

        @pl.when(fully_valid)
        def _():
            _accumulate(loss)

        @pl.when(jnp.logical_not(fully_valid))
        def _():
            row = blk * tile_rows + lax.broadcasted_iota(jnp.int32, loss.shape, 0)
            if rem:
                lane = lax.broadcasted_iota(jnp.int32, loss.shape, 1)
                valid = (row < full_rows) | ((row == full_rows) & (lane < rem))
            else:
                valid = row < full_rows
            _accumulate(jnp.where(valid, loss, 0.0))


def focal_loss(pred, true, *, gamma=GAMMA, alpha=ALPHA, approx_recip=True):
    """Focal-modulated BCEWithLogitsLoss with reduction='mean'.

    pred/true: same shape, any float dtype (f32/bf16/f16). Math is f32 in-kernel.
    """
    # TODO(synk): only the wrapped loss's default 'mean' reduction is implemented
    # ('sum'/'none' reductions of the PyTorch module are not exposed here).
    assert pred.shape == true.shape
    n_elems = pred.size
    assert n_elems > 0

    kind, cores = _chip_info()
    row_align = max(_row_align(pred.dtype), _row_align(true.dtype))

    full_rows, rem = divmod(n_elems, LANES)
    rows = full_rows + (1 if rem else 0)

    pred_flat = pred.reshape(-1)
    true_flat = true.reshape(-1)

    if rem == 0 and rows >= row_align:
        # Common case: lane-aligned and not tiny -> zero-copy reshape straight into the
        # kernel; any ragged last grid block is neutralized by the in-kernel mask.
        rows_store = rows
    else:
        # Lane tail (<128 elems) or tiny input: materialize a minimally padded copy.
        rows_store = _round_up(max(rows, 1), row_align)
        pad = rows_store * LANES - n_elems
        pred_flat = jnp.pad(pred_flat, (0, pad))
        true_flat = jnp.pad(true_flat, (0, pad))

    pred2d = pred_flat.reshape(rows_store, LANES)
    true2d = true_flat.reshape(rows_store, LANES)

    tile_rows = min(_max_tile_rows(kind), (rows_store // row_align) * row_align)
    total_blocks = pl.cdiv(rows_store, tile_rows)
    num_shards = cores if (cores > 1 and total_blocks >= cores) else 1
    steps = pl.cdiv(total_blocks, num_shards)
    needs_mask = num_shards * steps * tile_rows > full_rows
    acc_rows = next(a for a in (64, 32, 16, 8) if tile_rows % a == 0)

    if num_shards * steps == total_blocks:
        in_index = lambda c, i: (c * steps + i, 0)
    else:
        # Overhang grid slots re-read the last real block (in-bounds DMA); the kernel
        # masks their contribution to zero via the logical block index.
        in_index = lambda c, i: (jnp.minimum(c * steps + i, total_blocks - 1), 0)

    kernel = functools.partial(
        _focal_loss_kernel,
        gamma=gamma, alpha=alpha, approx_recip=approx_recip,
        steps=steps, tile_rows=tile_rows, acc_rows=acc_rows,
        full_rows=full_rows, rem=rem, needs_mask=needs_mask)

    def launch(dim_sems):
        return pl.pallas_call(
            kernel,
            out_shape=jax.ShapeDtypeStruct((num_shards, acc_rows, LANES), jnp.float32),
            grid_spec=pltpu.PrefetchScalarGridSpec(
                num_scalar_prefetch=0,
                grid=(num_shards, steps),
                in_specs=[
                    pl.BlockSpec((tile_rows, LANES), in_index),
                    pl.BlockSpec((tile_rows, LANES), in_index),
                ],
                out_specs=pl.BlockSpec((1, acc_rows, LANES), lambda c, i: (c, 0, 0)),
            ),
            compiler_params=_compiler_params(kind, dim_sems),
        )(pred2d, true2d)

    if num_shards > 1 and ("v7" in kind or "7x" in kind):
        try:
            partials = launch((pltpu.CORE_PARALLEL, pltpu.ARBITRARY))
        except Exception:
            partials = launch(("parallel", "arbitrary"))
    else:
        partials = launch(("parallel", "arbitrary"))

    # Single cross-lane reduce of the tiny per-shard partials + the 'mean' divide.
    return jnp.sum(partials) / jnp.float32(n_elems)


def focal_loss_ref(pred, true, *, gamma=GAMMA, alpha=ALPHA):
    x = pred.astype(jnp.float32)
    z = true.astype(jnp.float32)
    bce = jnp.maximum(x, 0.0) - x * z + jnp.log1p(jnp.exp(-jnp.abs(x)))
    p = jax.nn.sigmoid(x)
    p_t = z * p + (1.0 - z) * (1.0 - p)
    alpha_factor = z * alpha + (1.0 - z) * (1.0 - alpha)
    mod = (1.0 - p_t) ** gamma
    return jnp.mean(bce * alpha_factor * mod)


if __name__ == "__main__":
    key = jax.random.PRNGKey(0)
    k1, k2 = jax.random.split(key)

    # NCHW logits + {0,1} targets, as produced by a detection objectness/cls head.
    N, C, H, W = 2, 4, 16, 16
    pred = jax.random.normal(k1, (N, C, H, W), dtype=jnp.float32) * 2.0
    true = (jax.random.uniform(k2, (N, C, H, W)) > 0.7).astype(jnp.float32)
    ref = focal_loss_ref(pred, true)

    # Exact-reciprocal path: tight tolerance against the pure-JAX reference.
    out_exact = jax.block_until_ready(focal_loss(pred, true, approx_recip=False))
    assert jnp.allclose(out_exact, ref, rtol=1e-5, atol=1e-6), (out_exact, ref)

    # Default fast path (EUP approx reciprocal, ~2^-12 rel error): looser tolerance.
    out = jax.block_until_ready(focal_loss(pred, true))
    assert jnp.allclose(out, ref, rtol=5e-3, atol=1e-6), (out, ref)

    # Non-lane-aligned element count: exercises the (tiny) pad + in-kernel mask path.
    pred_odd = jax.random.normal(k1, (3, 5, 7, 11), dtype=jnp.float32)
    true_odd = (jax.random.uniform(k2, (3, 5, 7, 11)) > 0.6).astype(jnp.float32)
    out_odd = jax.block_until_ready(focal_loss(pred_odd, true_odd))
    ref_odd = focal_loss_ref(pred_odd, true_odd)
    assert jnp.allclose(out_odd, ref_odd, rtol=5e-3, atol=1e-6), (out_odd, ref_odd)

    # bf16 inputs stream at half the HBM bytes; math stays f32 in-kernel.
    pred_bf = pred.astype(jnp.bfloat16)
    true_bf = true.astype(jnp.bfloat16)
    out_bf = jax.block_until_ready(focal_loss(pred_bf, true_bf))
    ref_bf = focal_loss_ref(pred_bf.astype(jnp.float32), true_bf.astype(jnp.float32))
    assert jnp.allclose(out_bf, ref_bf, rtol=5e-3, atol=1e-6), (out_bf, ref_bf)

    print("KERNEL_OK")
</pallas_src>

<mosaic_0001>
module attributes {stable_mosaic.version = 11 : i64} {
  func.func @_focal_loss_kernel(%arg0: i32, %arg1: i32, %arg2: memref<16x128xf32, #tpu.memory_space<vmem>>, %arg3: memref<16x128xf32, #tpu.memory_space<vmem>>, %arg4: memref<1x16x128xf32, #tpu.memory_space<vmem>>) attributes {dimension_semantics = [#tpu.dimension_semantics<parallel>, #tpu.dimension_semantics<arbitrary>], iteration_bounds = array<i64: 1, 1>, scalar_prefetch = 0 : i64, scratch_operands = 0 : i64, tpu.core_type = #tpu.core_type<tc>, window_params = [{transform_indices = @transform_0, window_bounds = array<i64: 16, 128>}, {transform_indices = @transform_1, window_bounds = array<i64: 16, 128>}, {transform_indices = @transform_2, window_bounds = array<i64: 1, 16, 128>}]} {
    %c0_i32 = arith.constant 0 : i32
    %0 = arith.cmpi eq, %arg1, %c0_i32 : i32
    %1 = arith.extui %0 : i1 to i32
    %c0_i32_0 = arith.constant 0 : i32
    %2 = arith.cmpi ne, %1, %c0_i32_0 : i32
    scf.if %2 {
      %cst_19 = arith.constant 0.000000e+00 : f32
      %43 = vector.broadcast %cst_19 : f32 to vector<1x16x128xf32>
      %c0_20 = arith.constant 0 : index
      %c0_21 = arith.constant 0 : index
      %c0_22 = arith.constant 0 : index
      %44 = vector.load %arg4[%c0_20, %c0_21, %c0_22] : memref<1x16x128xf32, #tpu.memory_space<vmem>>, vector<1x16x128xf32>
      tpu.vector_store %arg4[%c0_20, %c0_21, %c0_22], %43 {strides = array<i32>} : memref<1x16x128xf32, #tpu.memory_space<vmem>>, vector<1x16x128xf32>,
    } else {
    }
    %c0 = arith.constant 0 : index
    %c0_1 = arith.constant 0 : index
    %3 = vector.load %arg2[%c0, %c0_1] : memref<16x128xf32, #tpu.memory_space<vmem>>, vector<16x128xf32>
    %c0_2 = arith.constant 0 : index
    %c0_3 = arith.constant 0 : index
    %4 = vector.load %arg3[%c0_2, %c0_3] : memref<16x128xf32, #tpu.memory_space<vmem>>, vector<16x128xf32>
    %5 = math.absf %3 : vector<16x128xf32>
    %cst = arith.constant 0.000000e+00 : f32
    %6 = vector.broadcast %cst : f32 to vector<16x128xf32>
    %7 = arith.subf %6, %5 : vector<16x128xf32>
    %8 = math.exp %7 : vector<16x128xf32>
    %cst_4 = arith.constant 1.000000e+00 : f32
    %9 = vector.broadcast %cst_4 : f32 to vector<16x128xf32>
    %10 = arith.addf %9, %8 : vector<16x128xf32>
    %cst_5 = arith.constant 1.000000e+00 : f32
    %11 = vector.broadcast %cst_5 : f32 to vector<16x128xf32>
    %12 = arith.divf %11, %10 : vector<16x128xf32>
    %cst_6 = arith.constant 0.000000e+00 : f32
    %13 = vector.broadcast %cst_6 : f32 to vector<16x128xf32>
    %14 = arith.maximumf %3, %13 : vector<16x128xf32>
    %15 = arith.mulf %3, %4 : vector<16x128xf32>
    %16 = arith.subf %14, %15 : vector<16x128xf32>
    %17 = math.log %10 : vector<16x128xf32>
    %18 = arith.addf %16, %17 : vector<16x128xf32>
    %cst_7 = arith.constant 0.000000e+00 : f32
    %19 = vector.broadcast %cst_7 : f32 to vector<16x128xf32>
    %20 = arith.cmpf oge, %3, %19 : vector<16x128xf32>
    %cst_8 = arith.constant 1.000000e+00 : f32
    %21 = vector.broadcast %cst_8 : f32 to vector<16x128xf32>
    %22 = arith.subf %21, %4 : vector<16x128xf32>
    %23 = arith.select %20, %22, %4 : vector<16x128xi1>, vector<16x128xf32>
    %cst_9 = arith.constant 1.000000e+00 : f32
    %24 = vector.broadcast %cst_9 : f32 to vector<16x128xf32>
    %25 = arith.subf %24, %23 : vector<16x128xf32>
    %26 = arith.mulf %25, %8 : vector<16x128xf32>
    %27 = arith.addf %23, %26 : vector<16x128xf32>
    %28 = arith.mulf %12, %27 : vector<16x128xf32>
    %29 = math.sqrt %28 : vector<16x128xf32>
    %30 = arith.mulf %28, %29 : vector<16x128xf32>
    %cst_10 = arith.constant -5.000000e-01 : f32
    %31 = vector.broadcast %cst_10 : f32 to vector<16x128xf32>
    %32 = arith.mulf %31, %4 : vector<16x128xf32>
    %cst_11 = arith.constant 7.500000e-01 : f32
    %33 = vector.broadcast %cst_11 : f32 to vector<16x128xf32>
    %34 = arith.addf %33, %32 : vector<16x128xf32>
    %35 = arith.mulf %18, %34 : vector<16x128xf32>
    %36 = arith.mulf %35, %30 : vector<16x128xf32>
    %c0_12 = arith.constant 0 : index
    %c0_13 = arith.constant 0 : index
    %c0_14 = arith.constant 0 : index
    %37 = vector.load %arg4[%c0_12, %c0_13, %c0_14] : memref<1x16x128xf32, #tpu.memory_space<vmem>>, vector<1x16x128xf32>
    %38 = vector.shape_cast %36 : vector<16x128xf32> to vector<1x16x128xf32>
    %cst_15 = arith.constant dense<0.000000e+00> : vector<16x128xf32>
    %39 = vector.multi_reduction <add>, %38, %cst_15 [0] : vector<1x16x128xf32> to vector<16x128xf32>
    %40 = vector.shape_cast %39 : vector<16x128xf32> to vector<1x16x128xf32>
    %41 = arith.addf %37, %40 : vector<1x16x128xf32>
    %c0_16 = arith.constant 0 : index
    %c0_17 = arith.constant 0 : index
    %c0_18 = arith.constant 0 : index
    %42 = vector.load %arg4[%c0_16, %c0_17, %c0_18] : memref<1x16x128xf32, #tpu.memory_space<vmem>>, vector<1x16x128xf32>
    tpu.vector_store %arg4[%c0_16, %c0_17, %c0_18], %41 {strides = array<i32>} : memref<1x16x128xf32, #tpu.memory_space<vmem>>, vector<1x16x128xf32>,
    return
  }
  func.func @transform_0(%arg0: i32, %arg1: i32) -> (i32, i32) {
    %c1_i32 = arith.constant 1 : i32
    %0 = arith.muli %arg0, %c1_i32 : i32
    %1 = arith.addi %0, %arg1 : i32
    %c0_i32 = arith.constant 0 : i32
    %c0_i32_0 = arith.constant 0 : i32
    return %1, %c0_i32 : i32, i32
  }
  func.func @transform_1(%arg0: i32, %arg1: i32) -> (i32, i32) {
    %c1_i32 = arith.constant 1 : i32
    %0 = arith.muli %arg0, %c1_i32 : i32
    %1 = arith.addi %0, %arg1 : i32
    %c0_i32 = arith.constant 0 : i32
    %c0_i32_0 = arith.constant 0 : i32
    return %1, %c0_i32 : i32, i32
  }
  func.func @transform_2(%arg0: i32, %arg1: i32) -> (i32, i32, i32) {
    %c0_i32 = arith.constant 0 : i32
    %c0_i32_0 = arith.constant 0 : i32
    %c0_i32_1 = arith.constant 0 : i32
    return %arg0, %c0_i32, %c0_i32_0 : i32, i32, i32
  }
}

</mosaic_0001>

<llo_original>
// kernel: tpu_custom_call.1
$region0: #{tpu_custom_call.1}
  #allocation0 [shape = 'u32[]', space=smem, size = 0x4, offset = 0x4, fixed_abs, tag = 'smem constant byte address 0x4 - core index']
  #allocation1 [shape = 'u32[144,128]{1,0:T(1,128)}', space=vmem, size = 0x12000, scoped, tag = 'internal scratch']
  %s0 = inlined_call_operand.hbm [shape: f32[16,128], index: 0, kind: input, shape index: {}]
  %s1 = inlined_call_operand.hbm [shape: f32[16,128], index: 1, kind: input, shape index: {}]
  %s2 = inlined_call_operand.hbm [shape: f32[1,16,128], index: 2, kind: output, shape index: {}]
  %s3 = sld [smem:[#allocation0]]
  $region30: #{tpu_custom_call.1} parent=0
    _
  %s5 = ssub.s32 1, %s3
  %s6 = scalar_select 0, %s5, %s3
  $region1: #{tpu_custom_call.1} parent=0
    #allocation2 [shape = 'u8[8192]{0}', space=vmem, size = 0x2000, scoped, tag = 'input window, operand 0, single buffered']
    #allocation3 [shape = 's32[1]{0}', space=sflag, size = 0x4, scoped, tag = 'scoped memory for tpu_custom_call.1']
    #allocation4 [shape = 's32[1]{0}', space=sflag, size = 0x4, scoped, tag = 'scoped memory for tpu_custom_call.1']
    #allocation5 [shape = 'u8[8192]{0}', space=vmem, size = 0x2000, scoped, tag = 'input window, operand 1, single buffered']
    #allocation6 [shape = 's32[1]{0}', space=sflag, size = 0x4, scoped, tag = 'scoped memory for tpu_custom_call.1']
    #allocation7 [shape = 'u8[8192]{0}', space=vmem, size = 0x2000, scoped, tag = 'output window, operand 0, single buffered']
    %7 = vsyncpa [#allocation3], 0
    %8 = vsyncpa [#allocation6], 0
    %9 = vsyncpa [#allocation4], 0
    // Predicated region
    $region2: #{tpu_custom_call.1} parent=1 // pred_check
      _
    $region3: #{tpu_custom_call.1} parent=1 // pred_check_branch
      %11 = sbr.rel (0) target = $region5
    $region4: #{tpu_custom_call.1} parent=1 // pred_region
      %s12 = sadd.s32 0, 0
      %s13 = smul.u32 2, %s12
      %s15 = ssub.s32 256, 256
      %16 = vsyncadd [#allocation3], %s15
      %s17 = smul.addr %s13, 128
      %s18 = scalar_lea.hbm %s0, %s17
      %s19 = sshll.u32 [#allocation2], 4
      %s20 = int_to_ptr.vmem [resolvable:$true] %s19
      %25 = dma.hbm_to_vmem [thread:$0]  %s18, 256, %s20, [#allocation3], 128, 128, 8
    $region5: #{tpu_custom_call.1} parent=1 // pred_fallthru
      _
    // Predicated region
    $region6: #{tpu_custom_call.1} parent=1 // pred_check
      _
    $region7: #{tpu_custom_call.1} parent=1 // pred_check_branch
      %27 = sbr.rel (0) target = $region9
    $region8: #{tpu_custom_call.1} parent=1 // pred_region
      %s28 = sadd.s32 0, 0
      %s29 = smul.u32 2, %s28
      %s31 = ssub.s32 256, 256
      %32 = vsyncadd [#allocation6], %s31
      %s33 = smul.addr %s29, 128
      %s34 = scalar_lea.hbm %s1, %s33
      %s35 = sshll.u32 [#allocation5], 4
      %s36 = int_to_ptr.vmem [resolvable:$true] %s35
      %41 = dma.hbm_to_vmem [thread:$0]  %s34, 256, %s36, [#allocation6], 128, 128, 8
    $region9: #{tpu_custom_call.1} parent=1 // pred_fallthru
      _
    // Predicated region
    $region10: #{tpu_custom_call.1} parent=1 // pred_check
      _
    $region11: #{tpu_custom_call.1} parent=1 // pred_check_branch
      %43 = sbr.rel (0) target = $region13
    $region12: #{tpu_custom_call.1} parent=1 // pred_region
      %44 = dma.done [#allocation3], 256
    $region13: #{tpu_custom_call.1} parent=1 // pred_fallthru
      _
    // Predicated region
    $region14: #{tpu_custom_call.1} parent=1 // pred_check
      _
    $region15: #{tpu_custom_call.1} parent=1 // pred_check_branch
      %46 = sbr.rel (0) target = $region17
    $region16: #{tpu_custom_call.1} parent=1 // pred_region
      %47 = dma.done [#allocation6], 256
    $region17: #{tpu_custom_call.1} parent=1 // pred_fallthru
      _
    %s48 = sadd.s32 0, 0
    %s49 = smul.u32 2, %s48
    %s50 = sadd.s32 0, 0
    %s51 = smul.u32 2, %s50
    %p52 = scmp.eq.s32.totalorder 0, 0
    // Predicated region
    $region18: #{tpu_custom_call.1} parent=1 // pred_check
      %p53 = pneg %p52
    $region19: #{tpu_custom_call.1} parent=1 // pred_check_branch
      %55 = sbr.rel (%p53) target = $region21
    $region20: #{tpu_custom_call.1} parent=1 // pred_region
      %56 = vst [vmem:[#allocation7] sm:$0xff] 0.0
      %57 = vst [vmem:[#allocation7 + $0x8] sm:$0xff] 0.0
    $region21: #{tpu_custom_call.1} parent=1 // pred_fallthru
      _
    %v58 = vld [vmem:[#allocation2] sm:$0xff]
    %v59 = vld [vmem:[#allocation2 + $0x8] sm:$0xff]
    %v60 = vld [vmem:[#allocation5] sm:$0xff]
    %v61 = vld [vmem:[#allocation5 + $0x8] sm:$0xff]
    %v62 = vand.u32 2147483647, %v58
    %v63 = vand.u32 2147483647, %v59
    %v64 = vsub.f32 0.0, %v62
    %v65 = vsub.f32 0.0, %v63
    %v66 = vmul.f32 %v64, 1.442695
    %v67 = vpow.pop %v66
    %v68 = vmul.f32 %v65, 1.442695
    %v69 = vpow.pop %v68
    %v70 = vadd.f32 %v67, 1.0
    %v71 = vadd.f32 %v69, 1.0
    %v72 = vrcp.pop %v70
    %v73 = vmul.f32 1.0, %v72
    %v74 = vrcp.pop %v71
    %v75 = vmul.f32 1.0, %v74
    %v76 = vmax.f32 %v58, 0.0
    %v77 = vmax.f32 %v59, 0.0
    %v78 = vmul.f32 %v58, %v60
    %v79 = vmul.f32 %v59, %v61
    %v80 = vsub.f32 %v76, %v78
    %v81 = vsub.f32 %v77, %v79
    %v82 = vlog2.pop %v70
    %v83 = vmul.f32 %v82, 0.6931472
    %v84 = vlog2.pop %v71
    %v85 = vmul.f32 %v84, 0.6931472
    %v86 = vadd.f32 %v80, %v83
    %v87 = vadd.f32 %v81, %v85
    %vm88 = vcmp.ge.f32.partialorder %v58, 0.0
    %vm89 = vcmp.ge.f32.partialorder %v59, 0.0
    %v90 = vsub.f32 1.0, %v60
    %v91 = vsub.f32 1.0, %v61
    %v92 = vsel %vm88, %v90, %v60
    %v93 = vsel %vm89, %v91, %v61
    %v94 = vsub.f32 1.0, %v92
    %v95 = vsub.f32 1.0, %v93
    %v96 = vmul.f32 %v94, %v67
    %v97 = vmul.f32 %v95, %v69
    %v98 = vadd.f32 %v92, %v96
    %v99 = vadd.f32 %v93, %v97
    %v100 = vmul.f32 %v73, %v98
    %v101 = vmul.f32 %v75, %v99
    %v102 = vrsqrt.pop %v100
    %v103 = vmul.f32 %v100, %v102
    %vm104 = vcmp.eq.f32.partialorder %v100, inf
    %v105 = vsel %vm104, %v100, %v103
    %vm106 = vcmp.eq.f32.partialorder %v100, 0.0
    %v107 = vand.u32 %v100, 2147483648
    %v108 = vsel %vm106, %v107, %v105
    %v109 = vrsqrt.pop %v101
    %v110 = vmul.f32 %v101, %v109
    %vm111 = vcmp.eq.f32.partialorder %v101, inf
    %v112 = vsel %vm111, %v101, %v110
    %vm113 = vcmp.eq.f32.partialorder %v101, 0.0
    %v114 = vand.u32 %v101, 2147483648
    %v115 = vsel %vm113, %v114, %v112
    %v116 = vmul.f32 %v100, %v108
    %v117 = vmul.f32 %v101, %v115
    %v118 = vmul.f32 %v60, -0.5
    %v119 = vmul.f32 %v61, -0.5
    %v120 = vadd.f32 %v118, 0.75
    %v121 = vadd.f32 %v119, 0.75
    %v122 = vmul.f32 %v86, %v120
    %v123 = vmul.f32 %v87, %v121
    %v124 = vmul.f32 %v122, %v116
    %v125 = vmul.f32 %v123, %v117
    %v126 = vld [vmem:[#allocation7] sm:$0xff]
    %v127 = vld [vmem:[#allocation7 + $0x8] sm:$0xff]
    %v128 = vadd.f32 %v124, 0.0
    %v129 = vadd.f32 %v125, 0.0
    %v130 = vadd.f32 %v126, %v128
    %v131 = vadd.f32 %v127, %v129
    %132 = vst [vmem:[#allocation7] sm:$0xff] %v130
    %133 = vst [vmem:[#allocation7 + $0x8] sm:$0xff] %v131
    // Predicated region
    $region22: #{tpu_custom_call.1} parent=1 // pred_check
      _
    $region23: #{tpu_custom_call.1} parent=1 // pred_check_branch
      %135 = sbr.rel (0) target = $region25
    $region24: #{tpu_custom_call.1} parent=1 // pred_region
      %s137 = ssub.s32 256, 256
      %138 = vsyncadd [#allocation4], %s137
      %s139 = sshll.u32 [#allocation7], 4
      %s140 = int_to_ptr.vmem [resolvable:$true] %s139
      %145 = dma.vmem_to_hbm [thread:$0]  %s140, 256, %s2, [#allocation4], 128, 128, 8
    $region25: #{tpu_custom_call.1} parent=1 // pred_fallthru
      _
    // Predicated region
    $region26: #{tpu_custom_call.1} parent=1 // pred_check
      _
    $region27: #{tpu_custom_call.1} parent=1 // pred_check_branch
      %147 = sbr.rel (0) target = $region29
    $region28: #{tpu_custom_call.1} parent=1 // pred_region
      %148 = dma.done [#allocation4], 256
    $region29: #{tpu_custom_call.1} parent=1 // pred_fallthru
      _
    %149 = vsyncpa [#allocation3], 1
    %150 = vsyncpa [#allocation6], 1
    %151 = vsyncpa [#allocation4], 1

</llo_original>
